<compile_context>
chip_gen: v6e
topology: v6e:2x2x1
jax: 0.10.0
libtpu: 0.0.40
codegen_flags: <defaults>
</compile_context>

<pallas_src>
import math

import jax
import jax.numpy as jnp
from jax.experimental import pallas as pl
from jax.experimental.pallas import tpu as pltpu

BN_EPS = 1e-5


def _cie_kernel(x_ref, p_ref, w_ref, b_ref, o_ref):
    """x_ref: (Bn, Cin, W*H)  p_ref: (W*H, S)  w_ref: (Cout, Cin)
       b_ref: (Bn*Cout, 1)    o_ref: (Bn*Cout, S),  S = H + W."""
    Bn, Cin, WH = x_ref.shape
    Cout = w_ref.shape[0]

    x = x_ref[...].astype(jnp.float32)                        # (Bn, Cin, WH)

    # 1x1 conv with folded BN scale, applied before pooling (linear ops commute).
    # Batched MXU matmul over Bn.
    w = jnp.broadcast_to(w_ref[...], (Bn, Cout, Cin))
    z = jnp.einsum("boc,bcp->bop", w, x,
                   preferred_element_type=jnp.float32)        # (Bn, Cout, WH)

    # Both adaptive average pools + concat == one 2-D matmul with the pooling matrix.
    z2 = z.reshape(Bn * Cout, WH)
    y = jnp.dot(z2, p_ref[...], preferred_element_type=jnp.float32)   # (Bn*Cout, S)

    # Folded BN bias, then SiLU.
    y = y + b_ref[...]
    y = y * jax.nn.sigmoid(y)

    o_ref[...] = y.astype(o_ref.dtype)
    # TODO(synk): output lane dim is S = H+W (<128 for small feature maps) -> masked
    # stores; negligible here since the output is ~0.1-1% of the streamed input bytes.


def coordinate_information_embedding(x, weight, bias, gamma, beta,
                                     running_mean, running_var):
    """x: (N, Cin, W, H). Returns (cd_h, cd_w) like the PyTorch module
    (BatchNorm in eval mode, using running statistics)."""
    N, Cin, W, H = x.shape
    Cout = weight.shape[0]
    S = H + W
    WH = W * H
    f32 = jnp.float32

    # ---- tiny host-side parameter prep -------------------------------------
    # Fold eval-mode BatchNorm into the conv:  y = (s*W) x + (s*(b - mu) + beta)
    s = gamma.astype(f32) * jax.lax.rsqrt(running_var.astype(f32) + BN_EPS)
    w_f = s[:, None] * weight.astype(f32).reshape(Cout, Cin)
    b_f = s * (bias.astype(f32) - running_mean.astype(f32)) + beta.astype(f32)

    # Pooling matrix P (W*H, H+W): first H columns = mean over W (pool_w / cd_w half),
    # last W columns = mean over H (pool_h / cd_h half).  Matches cat([x_w, x_h]).
    p_w = jnp.kron(jnp.full((W, 1), 1.0 / W, f32), jnp.eye(H, dtype=f32))   # (WH, H)
    p_h = jnp.kron(jnp.eye(W, dtype=f32), jnp.full((H, 1), 1.0 / H, f32))   # (WH, W)
    pool = jnp.concatenate([p_w, p_h], axis=1)                              # (WH, S)

    # ---- batch block size Bn: biggest that fits a conservative VMEM budget --
    itemsize = jnp.dtype(x.dtype).itemsize
    per_sample = Cin * WH * (2 * itemsize + 4) + Cout * WH * 4   # x dbl-buf + f32 copy + conv out
    budget = 18 * 1024 * 1024                                    # safe on v5e/v6e/v7x
    Bn = int(max(1, min(N, 128, budget // max(per_sample, 1))))
    if Bn < N:
        q = 8 // math.gcd(8, Cout)           # keep output block rows 8-aligned
        Bn = min(N, max(q, (Bn // q) * q))
    n_blocks = pl.cdiv(N, Bn)

    b_tiled = jnp.tile(b_f, Bn).reshape(Bn * Cout, 1)

    out = pl.pallas_call(
        _cie_kernel,
        out_shape=jax.ShapeDtypeStruct((N * Cout, S), x.dtype),
        grid_spec=pltpu.PrefetchScalarGridSpec(
            num_scalar_prefetch=0,
            grid=(n_blocks,),
            in_specs=[
                pl.BlockSpec((Bn, Cin, WH), lambda n: (n, 0, 0)),   # streamed x
                pl.BlockSpec((WH, S), lambda n: (0, 0)),            # resident P
                pl.BlockSpec((Cout, Cin), lambda n: (0, 0)),        # resident folded weight
                pl.BlockSpec((Bn * Cout, 1), lambda n: (0, 0)),     # resident folded bias
            ],
            out_specs=pl.BlockSpec((Bn * Cout, S), lambda n: (n, 0)),
        ),
        compiler_params=pltpu.CompilerParams(
            dimension_semantics=("parallel",),
            vmem_limit_bytes=64 * 1024 * 1024,
        ),
    )(x.reshape(N, Cin, WH), pool, w_f, b_tiled)    # NOTE: no dtype cast of x here

    out = out.reshape(N, Cout, S)
    cd_w = out[:, :, :H].reshape(N, Cout, 1, H)     # == permute(0,1,3,2) of (N,Cout,H,1)
    cd_h = out[:, :, H:].reshape(N, Cout, W, 1)
    return cd_h, cd_w


def _reference(x, weight, bias, gamma, beta, running_mean, running_var):
    """Pure-JAX reference matching the PyTorch forward (BN in eval mode)."""
    N, Cin, W, H = x.shape
    x_h = jnp.mean(x, axis=3)                    # (N, Cin, W)
    x_w = jnp.mean(x, axis=2)                    # (N, Cin, H)
    d = jnp.concatenate([x_w, x_h], axis=2)      # (N, Cin, H+W)
    y = jnp.einsum("oc,ncs->nos", weight, d) + bias[None, :, None]
    y = (y - running_mean[None, :, None]) * (
        gamma[None, :, None] / jnp.sqrt(running_var[None, :, None] + BN_EPS)
    ) + beta[None, :, None]
    y = y * jax.nn.sigmoid(y)
    cd_w = y[:, :, :H].reshape(N, -1, 1, H)
    cd_h = y[:, :, H:].reshape(N, -1, W, 1)
    return cd_h, cd_w


if __name__ == "__main__":
    N, Cin, Cout, W, H = 2, 4, 8, 16, 16

    key = jax.random.PRNGKey(0)
    kx, kw, kb, kg, kbe, km, kv = jax.random.split(key, 7)

    x = jax.random.normal(kx, (N, Cin, W, H), dtype=jnp.float32)
    weight = jax.random.normal(kw, (Cout, Cin), dtype=jnp.float32) * 0.1   # Conv2d 1x1 weight
    bias = jax.random.normal(kb, (Cout,), dtype=jnp.float32) * 0.1
    gamma = 1.0 + 0.1 * jax.random.normal(kg, (Cout,), dtype=jnp.float32)  # BN weight
    beta = 0.1 * jax.random.normal(kbe, (Cout,), dtype=jnp.float32)        # BN bias
    running_mean = 0.1 * jax.random.normal(km, (Cout,), dtype=jnp.float32)
    running_var = 0.5 + jnp.abs(jax.random.normal(kv, (Cout,), dtype=jnp.float32))

    cd_h, cd_w = coordinate_information_embedding(
        x, weight, bias, gamma, beta, running_mean, running_var)
    jax.block_until_ready((cd_h, cd_w))

    ref_h, ref_w = _reference(x, weight, bias, gamma, beta, running_mean, running_var)

    assert cd_h.shape == (N, Cout, W, 1), cd_h.shape
    assert cd_w.shape == (N, Cout, 1, H), cd_w.shape
    assert jnp.allclose(cd_h, ref_h, atol=1e-5, rtol=1e-5)
    assert jnp.allclose(cd_w, ref_w, atol=1e-5, rtol=1e-5)

    print("KERNEL_OK")
</pallas_src>

<mosaic_0001>
module attributes {stable_mosaic.version = 11 : i64} {
  func.func @_cie_kernel(%arg0: i32, %arg1: memref<2x4x256xf32, #tpu.memory_space<vmem>>, %arg2: memref<256x32xf32, #tpu.memory_space<vmem>>, %arg3: memref<8x4xf32, #tpu.memory_space<vmem>>, %arg4: memref<16x1xf32, #tpu.memory_space<vmem>>, %arg5: memref<16x32xf32, #tpu.memory_space<vmem>>) attributes {dimension_semantics = [#tpu.dimension_semantics<parallel>], iteration_bounds = array<i64: 1>, scalar_prefetch = 0 : i64, scratch_operands = 0 : i64, tpu.core_type = #tpu.core_type<tc>, window_params = [{transform_indices = @transform_0, window_bounds = array<i64: 2, 4, 256>}, {pipeline_mode = #tpu.pipeline_mode<synchronous>, transform_indices = @transform_1, window_bounds = array<i64: 256, 32>}, {pipeline_mode = #tpu.pipeline_mode<synchronous>, transform_indices = @transform_2, window_bounds = array<i64: 8, 4>}, {pipeline_mode = #tpu.pipeline_mode<synchronous>, transform_indices = @transform_3, window_bounds = array<i64: 16, 1>}, {transform_indices = @transform_4, window_bounds = array<i64: 16, 32>}]} {
    %c0 = arith.constant 0 : index
    %c0_0 = arith.constant 0 : index
    %c0_1 = arith.constant 0 : index
    %0 = vector.load %arg1[%c0, %c0_0, %c0_1] : memref<2x4x256xf32, #tpu.memory_space<vmem>>, vector<2x4x256xf32>
    %c0_2 = arith.constant 0 : index
    %c0_3 = arith.constant 0 : index
    %1 = vector.load %arg3[%c0_2, %c0_3] : memref<8x4xf32, #tpu.memory_space<vmem>>, vector<8x4xf32>
    %2 = vector.shape_cast %1 : vector<8x4xf32> to vector<1x8x4xf32>
    %3 = vector.broadcast %2 : vector<1x8x4xf32> to vector<2x8x4xf32>
    "tpu.trace_start"() <{level = 10 : i32, message = "boc,bcp->bop"}> : () -> ()
    %cst = arith.constant dense<0.000000e+00> : vector<2x8x256xf32>
    %4 = tpu.matmul %3, %0, %cst {dimension_numbers = #tpu.dot_dimension_numbers<[2], [1], [1], [2], [0, 0, 0, 1, 1, 2], [0], [0]>} : vector<2x8x4xf32>, vector<2x4x256xf32>, vector<2x8x256xf32> -> vector<2x8x256xf32>
    "tpu.trace_stop"() : () -> ()
    %5 = vector.shape_cast %4 : vector<2x8x256xf32> to vector<16x256xf32>
    %c0_4 = arith.constant 0 : index
    %c0_5 = arith.constant 0 : index
    %6 = vector.load %arg2[%c0_4, %c0_5] : memref<256x32xf32, #tpu.memory_space<vmem>>, vector<256x32xf32>
    %cst_6 = arith.constant dense<0.000000e+00> : vector<16x32xf32>
    %7 = tpu.matmul %5, %6, %cst_6 {dimension_numbers = #tpu.dot_dimension_numbers<[1], [0], [0], [1], [0, 0, 1, 1], [], []>} : vector<16x256xf32>, vector<256x32xf32>, vector<16x32xf32> -> vector<16x32xf32>
    %c0_7 = arith.constant 0 : index
    %c0_8 = arith.constant 0 : index
    %8 = vector.load %arg4[%c0_7, %c0_8] : memref<16x1xf32, #tpu.memory_space<vmem>>, vector<16x1xf32>
    %9 = vector.broadcast %8 : vector<16x1xf32> to vector<16x32xf32>
    %10 = arith.addf %7, %9 : vector<16x32xf32>
    %11 = arith.negf %10 : vector<16x32xf32>
    %12 = math.exp %11 : vector<16x32xf32>
    %cst_9 = arith.constant 1.000000e+00 : f32
    %13 = vector.broadcast %cst_9 : f32 to vector<16x32xf32>
    %14 = arith.addf %13, %12 : vector<16x32xf32>
    %15 = arith.divf %13, %14 : vector<16x32xf32>
    %16 = arith.mulf %10, %15 : vector<16x32xf32>
    %c0_10 = arith.constant 0 : index
    %c0_11 = arith.constant 0 : index
    %17 = vector.load %arg5[%c0_10, %c0_11] : memref<16x32xf32, #tpu.memory_space<vmem>>, vector<16x32xf32>
    tpu.vector_store %arg5[%c0_10, %c0_11], %16 {strides = array<i32>} : memref<16x32xf32, #tpu.memory_space<vmem>>, vector<16x32xf32>,
    return
  }
  func.func @transform_0(%arg0: i32) -> (i32, i32, i32) {
    %c0_i32 = arith.constant 0 : i32
    %c0_i32_0 = arith.constant 0 : i32
    %c0_i32_1 = arith.constant 0 : i32
    return %arg0, %c0_i32, %c0_i32_0 : i32, i32, i32
  }
  func.func @transform_1(%arg0: i32) -> (i32, i32) {
    %c0_i32 = arith.constant 0 : i32
    %c0_i32_0 = arith.constant 0 : i32
    %c0_i32_1 = arith.constant 0 : i32
    return %c0_i32, %c0_i32_0 : i32, i32
  }
  func.func @transform_2(%arg0: i32) -> (i32, i32) {
    %c0_i32 = arith.constant 0 : i32
    %c0_i32_0 = arith.constant 0 : i32
    %c0_i32_1 = arith.constant 0 : i32
    return %c0_i32, %c0_i32_0 : i32, i32
  }
  func.func @transform_3(%arg0: i32) -> (i32, i32) {
    %c0_i32 = arith.constant 0 : i32
    %c0_i32_0 = arith.constant 0 : i32
    %c0_i32_1 = arith.constant 0 : i32
    return %c0_i32, %c0_i32_0 : i32, i32
  }
  func.func @transform_4(%arg0: i32) -> (i32, i32) {
    %c0_i32 = arith.constant 0 : i32
    %c0_i32_0 = arith.constant 0 : i32
    return %arg0, %c0_i32 : i32, i32
  }
}

</mosaic_0001>

<llo_original>
// kernel: tpu_custom_call.1
$region0: #{tpu_custom_call.1}
  #allocation0 [shape = 'u32[]', space=smem, size = 0x4, offset = 0x4, fixed_abs, tag = 'smem constant byte address 0x4 - core index']
  #allocation1 [shape = 'u32[144,128]{1,0:T(1,128)}', space=vmem, size = 0x12000, scoped, tag = 'internal scratch']
  %s0 = inlined_call_operand.vmem [shape: f32[2,4,256], index: 0, kind: input, shape index: {}]
  %s1 = inlined_call_operand.vmem [shape: f32[256,32], index: 1, kind: input, shape index: {}]
  %s2 = inlined_call_operand.vmem [shape: f32[8,4], index: 2, kind: input, shape index: {}]
  %s3 = inlined_call_operand.vmem [shape: f32[16,1], index: 3, kind: input, shape index: {}]
  %s4 = inlined_call_operand.hbm [shape: f32[16,32], index: 4, kind: output, shape index: {}]
  %s5 = sld [smem:[#allocation0]]
  $region26: #{tpu_custom_call.1} parent=0
    _
  %s7 = ssub.s32 1, %s5
  %s8 = scalar_select 0, %s7, %s5
  $region1: #{tpu_custom_call.1} parent=0
    #allocation2 [shape = 'u8[8192]{0}', space=vmem, size = 0x2000, scoped, tag = 'output window, operand 0, single buffered']
    #allocation3 [shape = 's32[1]{0}', space=sflag, size = 0x4, scoped, tag = 'scoped memory for tpu_custom_call.1']
    %9 = vsyncpa [#allocation3], 0
    // Predicated region
    $region2: #{tpu_custom_call.1} parent=1 // pred_check
      _
    $region3: #{tpu_custom_call.1} parent=1 // pred_check_branch
      %11 = sbr.rel (0) target = $region5
    $region4: #{tpu_custom_call.1} parent=1 // pred_region
      _
    $region5: #{tpu_custom_call.1} parent=1 // pred_fallthru
      _
    // Predicated region
    $region6: #{tpu_custom_call.1} parent=1 // pred_check
      _
    $region7: #{tpu_custom_call.1} parent=1 // pred_check_branch
      %13 = sbr.rel (0) target = $region9
    $region8: #{tpu_custom_call.1} parent=1 // pred_region
      _
    $region9: #{tpu_custom_call.1} parent=1 // pred_fallthru
      _
    // Predicated region
    $region10: #{tpu_custom_call.1} parent=1 // pred_check
      _
    $region11: #{tpu_custom_call.1} parent=1 // pred_check_branch
      %15 = sbr.rel (0) target = $region13
    $region12: #{tpu_custom_call.1} parent=1 // pred_region
      _
    $region13: #{tpu_custom_call.1} parent=1 // pred_fallthru
      _
    // Predicated region
    $region14: #{tpu_custom_call.1} parent=1 // pred_check
      _
    $region15: #{tpu_custom_call.1} parent=1 // pred_check_branch
      %17 = sbr.rel (0) target = $region17
    $region16: #{tpu_custom_call.1} parent=1 // pred_region
      _
    $region17: #{tpu_custom_call.1} parent=1 // pred_fallthru
      _
    %v18 = vld [vmem:[%s0] sm:$0xff]
    %v19 = vld [vmem:[%s0 + $0x8] sm:$0xff]
    %v20 = vld [vmem:[%s2] sm:$0xff]
    %v22 = vcombine.high %v18, %v18
    %vm23 = vcmask 31744
    %v25 = vsel %vm23, %v20, 0
    %vm27 = vcmask 1043456
    %v28 = vsel %vm27, %v18, 0
    %v30 = vsel %vm27, %v22, 0
    %32 = vmatprep.subr.mxu0 0.0
    %33 = vmatpush1.msra.mxu0 0.0
    %34 = vmatprep.subr.mxu0 0.0
    %35 = vmatpush1.msra.mxu0 0.0
    %36 = vmatprep.subr.mxu0 0.0
    %37 = vmatpush1.msra.mxu0 0.0
    %38 = vmatprep.subr.mxu0 0.0
    %39 = vmatpush1.msra.mxu0 0.0
    %40 = vmatprep.subr.mxu0 0.0
    %41 = vmatpush1.msra.mxu0 0.0
    %42 = vmatprep.subr.mxu0 0.0
    %43 = vmatpush1.msra.mxu0 0.0
    %44 = vmatprep.subr.mxu0 0.0
    %45 = vmatpush1.msra.mxu0 0.0
    %46 = vmatprep.subr.mxu0 0.0
    %47 = vmatpush1.msra.mxu0 0.0
    %48 = vmatprep.subr.mxu0 0.0
    %49 = vmatpush1.msra.mxu0 0.0
    %50 = vmatprep.subr.mxu0 0.0
    %51 = vmatpush1.msra.mxu0 0.0
    %52 = vmatprep.subr.mxu0 0.0
    %53 = vmatpush1.msra.mxu0 0.0
    %54 = vmatprep.subr.mxu0 0.0
    %55 = vmatpush1.msra.mxu0 0.0
    %56 = vmatprep.subr.mxu0 0.0
    %57 = vmatpush1.msra.mxu0 0.0
    %58 = vmatprep.subr.mxu0 0.0
    %59 = vmatpush1.msra.mxu0 0.0
    %60 = vmatprep.subr.mxu0 0.0
    %61 = vmatpush1.msra.mxu0 0.0
    %62 = vmatprep.subr.mxu0 %v30
    %63 = vmatpush1.msra.mxu0 %v28
    %64 = vmatprep.subr.mxu0 0.0
    %65 = vmatpush2.msra.mxu0 0.0
    %66 = vmatprep.subr.mxu0 0.0
    %67 = vmatpush2.msra.mxu0 0.0
    %68 = vmatprep.subr.mxu0 0.0
    %69 = vmatpush2.msra.mxu0 0.0
    %70 = vmatprep.subr.mxu0 0.0
    %71 = vmatpush2.msra.mxu0 0.0
    %72 = vmatprep.subr.mxu0 0.0
    %73 = vmatpush2.msra.mxu0 0.0
    %74 = vmatprep.subr.mxu0 0.0
    %75 = vmatpush2.msra.mxu0 0.0
    %76 = vmatprep.subr.mxu0 0.0
    %77 = vmatpush2.msra.mxu0 0.0
    %78 = vmatprep.subr.mxu0 0.0
    %79 = vmatpush2.msra.mxu0 0.0
    %80 = vmatprep.subr.mxu0 0.0
    %81 = vmatpush2.msra.mxu0 0.0
    %82 = vmatprep.subr.mxu0 0.0
    %83 = vmatpush2.msra.mxu0 0.0
    %84 = vmatprep.subr.mxu0 0.0
    %85 = vmatpush2.msra.mxu0 0.0
    %86 = vmatprep.subr.mxu0 0.0
    %87 = vmatpush2.msra.mxu0 0.0
    %88 = vmatprep.subr.mxu0 0.0
    %89 = vmatpush2.msra.mxu0 0.0
    %90 = vmatprep.subr.mxu0 0.0
    %91 = vmatpush2.msra.mxu0 0.0
    %92 = vmatprep.subr.mxu0 0.0
    %93 = vmatpush2.msra.mxu0 0.0
    %94 = vmatprep.subr.mxu0 0.0
    %95 = vmatpush2.msra.mxu0 0.0
    %96 = vmatprep.mubr.f32.mxu0 0.0
    %97 = vmatmul.mubr.f32.gmra.mxu0 %v25
    %v98 = vpop.f32.mrf.mxu0
    %v99 = vadd.f32 0.0, %v98
    %v100 = vpop.f32.mrf.mxu0
    %v101 = vadd.f32 0.0, %v100
    %102 = vdwg.mxu0
    %v104 = vcombine.high %v19, %v19
    %v105 = vsel %vm27, %v19, 0
    %v107 = vsel %vm27, %v104, 0
    %109 = vmatprep.subr.mxu0 0.0
    %110 = vmatpush1.msra.mxu0 0.0
    %111 = vmatprep.subr.mxu0 0.0
    %112 = vmatpush1.msra.mxu0 0.0
    %113 = vmatprep.subr.mxu0 0.0
    %114 = vmatpush1.msra.mxu0 0.0
    %115 = vmatprep.subr.mxu0 0.0
    %116 = vmatpush1.msra.mxu0 0.0
    %117 = vmatprep.subr.mxu0 0.0
    %118 = vmatpush1.msra.mxu0 0.0
    %119 = vmatprep.subr.mxu0 0.0
    %120 = vmatpush1.msra.mxu0 0.0
    %121 = vmatprep.subr.mxu0 0.0
    %122 = vmatpush1.msra.mxu0 0.0
    %123 = vmatprep.subr.mxu0 0.0
    %124 = vmatpush1.msra.mxu0 0.0
    %125 = vmatprep.subr.mxu0 0.0
    %126 = vmatpush1.msra.mxu0 0.0
    %127 = vmatprep.subr.mxu0 0.0
    %128 = vmatpush1.msra.mxu0 0.0
    %129 = vmatprep.subr.mxu0 0.0
    %130 = vmatpush1.msra.mxu0 0.0
    %131 = vmatprep.subr.mxu0 0.0
    %132 = vmatpush1.msra.mxu0 0.0
    %133 = vmatprep.subr.mxu0 0.0
    %134 = vmatpush1.msra.mxu0 0.0
    %135 = vmatprep.subr.mxu0 0.0
    %136 = vmatpush1.msra.mxu0 0.0
    %137 = vmatprep.subr.mxu0 0.0
    %138 = vmatpush1.msra.mxu0 0.0
    %139 = vmatprep.subr.mxu0 %v107
    %140 = vmatpush1.msra.mxu0 %v105
    %141 = vmatprep.subr.mxu0 0.0
    %142 = vmatpush2.msra.mxu0 0.0
    %143 = vmatprep.subr.mxu0 0.0
    %144 = vmatpush2.msra.mxu0 0.0
    %145 = vmatprep.subr.mxu0 0.0
    %146 = vmatpush2.msra.mxu0 0.0
    %147 = vmatprep.subr.mxu0 0.0
    %148 = vmatpush2.msra.mxu0 0.0
    %149 = vmatprep.subr.mxu0 0.0
    %150 = vmatpush2.msra.mxu0 0.0
    %151 = vmatprep.subr.mxu0 0.0
    %152 = vmatpush2.msra.mxu0 0.0
    %153 = vmatprep.subr.mxu0 0.0
    %154 = vmatpush2.msra.mxu0 0.0
    %155 = vmatprep.subr.mxu0 0.0
    %156 = vmatpush2.msra.mxu0 0.0
    %157 = vmatprep.subr.mxu0 0.0
    %158 = vmatpush2.msra.mxu0 0.0
    %159 = vmatprep.subr.mxu0 0.0
    %160 = vmatpush2.msra.mxu0 0.0
    %161 = vmatprep.subr.mxu0 0.0
    %162 = vmatpush2.msra.mxu0 0.0
    %163 = vmatprep.subr.mxu0 0.0
    %164 = vmatpush2.msra.mxu0 0.0
    %165 = vmatprep.subr.mxu0 0.0
    %166 = vmatpush2.msra.mxu0 0.0
    %167 = vmatprep.subr.mxu0 0.0
    %168 = vmatpush2.msra.mxu0 0.0
    %169 = vmatprep.subr.mxu0 0.0
    %170 = vmatpush2.msra.mxu0 0.0
    %171 = vmatprep.subr.mxu0 0.0
    %172 = vmatpush2.msra.mxu0 0.0
    %173 = vmatprep.mubr.f32.mxu0 0.0
    %174 = vmatmul.mubr.f32.gmra.mxu0 %v25
    %v175 = vpop.f32.mrf.mxu0
    %v176 = vadd.f32 0.0, %v175
    %v177 = vpop.f32.mrf.mxu0
    %v178 = vadd.f32 0.0, %v177
    %179 = vdwg.mxu0
    %v180 = vld [vmem:[%s1] sm:$0xff]
    %v181 = vld [vmem:[%s1 + $0x8] sm:$0xff]
    %v182 = vld [vmem:[%s1 + $0x10] sm:$0xff]
    %v183 = vld [vmem:[%s1 + $0x18] sm:$0xff]
    %v184 = vld [vmem:[%s1 + $0x20] sm:$0xff]
    %v185 = vld [vmem:[%s1 + $0x28] sm:$0xff]
    %v186 = vld [vmem:[%s1 + $0x30] sm:$0xff]
    %v187 = vld [vmem:[%s1 + $0x38] sm:$0xff]
    %v188 = vld [vmem:[%s1 + $0x40] sm:$0xff]
    %v189 = vld [vmem:[%s1 + $0x48] sm:$0xff]
    %v190 = vld [vmem:[%s1 + $0x50] sm:$0xff]
    %v191 = vld [vmem:[%s1 + $0x58] sm:$0xff]
    %v192 = vld [vmem:[%s1 + $0x60] sm:$0xff]
    %v193 = vld [vmem:[%s1 + $0x68] sm:$0xff]
    %v194 = vld [vmem:[%s1 + $0x70] sm:$0xff]
    %v195 = vld [vmem:[%s1 + $0x78] sm:$0xff]
    %v196 = vld [vmem:[%s1 + $0x80] sm:$0xff]
    %v197 = vld [vmem:[%s1 + $0x88] sm:$0xff]
    %v198 = vld [vmem:[%s1 + $0x90] sm:$0xff]
    %v199 = vld [vmem:[%s1 + $0x98] sm:$0xff]
    %v200 = vld [vmem:[%s1 + $0xa0] sm:$0xff]
    %v201 = vld [vmem:[%s1 + $0xa8] sm:$0xff]
    %v202 = vld [vmem:[%s1 + $0xb0] sm:$0xff]
    %v203 = vld [vmem:[%s1 + $0xb8] sm:$0xff]
    %v204 = vld [vmem:[%s1 + $0xc0] sm:$0xff]
    %v205 = vld [vmem:[%s1 + $0xc8] sm:$0xff]
    %v206 = vld [vmem:[%s1 + $0xd0] sm:$0xff]
    %v207 = vld [vmem:[%s1 + $0xd8] sm:$0xff]
    %v208 = vld [vmem:[%s1 + $0xe0] sm:$0xff]
    %v209 = vld [vmem:[%s1 + $0xe8] sm:$0xff]
    %v210 = vld [vmem:[%s1 + $0xf0] sm:$0xff]
    %v211 = vld [vmem:[%s1 + $0xf8] sm:$0xff]
    %v212 = vld [vmem:[%s3] sm:$0xff]
    %v213 = vld [vmem:[%s3 + $0x8] sm:$0xff]
    %215 = vset.pattern.permute.xlu0 0
    %216 = vperm.xlu0 %215, %v212
    %v217 = vpop.permute.xlu0 %216
    %220 = vset.pattern.permute.xlu0 0
    %221 = vperm.xlu0 %220, %v213
    %v222 = vpop.permute.xlu0 %221
    %224 = vmatprep.subr.mxu0 0.0
    %225 = vmatpush1.msra.mxu0 %v195
    %226 = vmatprep.subr.mxu0 0.0
    %227 = vmatpush1.msra.mxu0 %v194
    %228 = vmatprep.subr.mxu0 0.0
    %229 = vmatpush1.msra.mxu0 %v193
    %230 = vmatprep.subr.mxu0 0.0
    %231 = vmatpush1.msra.mxu0 %v192
    %232 = vmatprep.subr.mxu0 0.0
    %233 = vmatpush1.msra.mxu0 %v191
    %234 = vmatprep.subr.mxu0 0.0
    %235 = vmatpush1.msra.mxu0 %v190
    %236 = vmatprep.subr.mxu0 0.0
    %237 = vmatpush1.msra.mxu0 %v189
    %238 = vmatprep.subr.mxu0 0.0
    %239 = vmatpush1.msra.mxu0 %v188
    %240 = vmatprep.subr.mxu0 0.0
    %241 = vmatpush1.msra.mxu0 %v187
    %242 = vmatprep.subr.mxu0 0.0
    %243 = vmatpush1.msra.mxu0 %v186
    %244 = vmatprep.subr.mxu0 0.0
    %245 = vmatpush1.msra.mxu0 %v185
    %246 = vmatprep.subr.mxu0 0.0
    %247 = vmatpush1.msra.mxu0 %v184
    %248 = vmatprep.subr.mxu0 0.0
    %249 = vmatpush1.msra.mxu0 %v183
    %250 = vmatprep.subr.mxu0 0.0
    %251 = vmatpush1.msra.mxu0 %v182
    %252 = vmatprep.subr.mxu0 0.0
    %253 = vmatpush1.msra.mxu0 %v181
    %254 = vmatprep.subr.mxu0 0.0
    %255 = vmatpush1.msra.mxu0 %v180
    %256 = vmatprep.subr.mxu0 0.0
    %257 = vmatpush2.msra.mxu0 %v211
    %258 = vmatprep.subr.mxu0 0.0
    %259 = vmatpush2.msra.mxu0 %v210
    %260 = vmatprep.subr.mxu0 0.0
    %261 = vmatpush2.msra.mxu0 %v209
    %262 = vmatprep.subr.mxu0 0.0
    %263 = vmatpush2.msra.mxu0 %v208
    %264 = vmatprep.subr.mxu0 0.0
    %265 = vmatpush2.msra.mxu0 %v207
    %266 = vmatprep.subr.mxu0 0.0
    %267 = vmatpush2.msra.mxu0 %v206
    %268 = vmatprep.subr.mxu0 0.0
    %269 = vmatpush2.msra.mxu0 %v205
    %270 = vmatprep.subr.mxu0 0.0
    %271 = vmatpush2.msra.mxu0 %v204
    %272 = vmatprep.subr.mxu0 0.0
    %273 = vmatpush2.msra.mxu0 %v203
    %274 = vmatprep.subr.mxu0 0.0
    %275 = vmatpush2.msra.mxu0 %v202
    %276 = vmatprep.subr.mxu0 0.0
    %277 = vmatpush2.msra.mxu0 %v201
    %278 = vmatprep.subr.mxu0 0.0
    %279 = vmatpush2.msra.mxu0 %v200
    %280 = vmatprep.subr.mxu0 0.0
    %281 = vmatpush2.msra.mxu0 %v199
    %282 = vmatprep.subr.mxu0 0.0
    %283 = vmatpush2.msra.mxu0 %v198
    %284 = vmatprep.subr.mxu0 0.0
    %285 = vmatpush2.msra.mxu0 %v197
    %286 = vmatprep.subr.mxu0 0.0
    %287 = vmatpush2.msra.mxu0 %v196
    %288 = vmatprep.mubr.f32.mxu0 %v101
    %289 = vmatmul.mubr.f32.gmra.mxu0 %v99
    %v290 = vpop.f32.mrf.mxu0
    %v291 = vadd.f32 %v217, %v290
    %v292 = vpop.f32.mrf.mxu0
    %293 = vmatprep.mubr.f32.mxu0 %v178
    %294 = vmatmul.mubr.f32.gmra.mxu0 %v176
    %v295 = vpop.f32.mrf.mxu0
    %v296 = vadd.f32 %v222, %v295
    %v297 = vpop.f32.mrf.mxu0
    %298 = vdwg.mxu0
    %v299 = vxor.u32 %v291, 2147483648
    %v300 = vxor.u32 %v296, 2147483648
    %v301 = vmul.f32 %v299, 1.442695
    %v302 = vpow.pop %v301
    %v303 = vmul.f32 %v300, 1.442695
    %v304 = vpow.pop %v303
    %v305 = vadd.f32 %v302, 1.0
    %v306 = vadd.f32 %v304, 1.0
    %v307 = vrcp.pop %v305
    %v308 = vmul.f32 1.0, %v307
    %v309 = vrcp.pop %v306
    %v310 = vmul.f32 1.0, %v309
    %v311 = vmul.f32 %v291, %v308
    %v312 = vmul.f32 %v296, %v310
    %vm313 = vcmask 261120
    %314 = vst.msk [vmem:[#allocation2] sm:$0xff] %vm313, %v311
    %315 = vst.msk [vmem:[#allocation2 + $0x8] sm:$0xff] %vm313, %v312
    // Predicated region
    $region18: #{tpu_custom_call.1} parent=1 // pred_check
      _
    $region19: #{tpu_custom_call.1} parent=1 // pred_check_branch
      %317 = sbr.rel (0) target = $region21
    $region20: #{tpu_custom_call.1} parent=1 // pred_region
      %s319 = ssub.s32 256, 256
      %320 = vsyncadd [#allocation3], %s319
      %s321 = sshll.u32 [#allocation2], 4
      %s322 = int_to_ptr.vmem [resolvable:$true] %s321
      %327 = dma.vmem_to_hbm [thread:$0]  %s322, 256, %s4, [#allocation3], 128, 128, 8
    $region21: #{tpu_custom_call.1} parent=1 // pred_fallthru
      _
    // Predicated region
    $region22: #{tpu_custom_call.1} parent=1 // pred_check
      _
    $region23: #{tpu_custom_call.1} parent=1 // pred_check_branch
      %329 = sbr.rel (0) target = $region25
    $region24: #{tpu_custom_call.1} parent=1 // pred_region
      %330 = dma.done [#allocation3], 256
    $region25: #{tpu_custom_call.1} parent=1 // pred_fallthru
      _
    %331 = vsyncpa [#allocation3], 1

</llo_original>
